<compile_context>
chip_gen: v6e
topology: v6e:2x2x1
jax: 0.10.0
libtpu: 0.0.40
codegen_flags: <defaults>
</compile_context>

<pallas_src>
import jax
import jax.numpy as jnp
from jax import lax
from jax.experimental import pallas as pl
from jax.experimental.pallas import tpu as pltpu


def _attention_kernel(q_ref, k_ref, v_ref, m_ref, wv_ref, o_ref):
    # Block shapes: q (BB, Sq, D) f32, k/v (BB, Sk, D) f32, m/wv (D, D) bf16.
    q = q_ref[...].astype(jnp.bfloat16)
    k = k_ref[...].astype(jnp.bfloat16)
    v = v_ref[...].astype(jnp.bfloat16)
    m = m_ref[...]    # bf16: (1/sqrt(d_model)) * W_q^T @ W_k  (scale + K-proj folded)
    wv = wv_ref[...]  # bf16: W_v^T

    # scores = enc_q @ M @ enc_k^T   (== scaled q @ k^T of the reference).
    # Shared-weight projection first (one MXU pass over the whole batch block).
    t = jnp.einsum("bqd,de->bqe", q, m,
                   preferred_element_type=jnp.float32).astype(jnp.bfloat16)
    scores = lax.dot_general(
        t, k,
        dimension_numbers=(((2,), (2,)), ((0,), (0,))),   # NT, batched
        preferred_element_type=jnp.float32)               # (BB, Sq, Sk) f32

    # TODO(synk): optional boolean `mask` (masked_fill with -inf) of the PyTorch
    # module is not wired through; the reference default path is mask=None.

    # Numerically stable softmax over the key axis (col_dim), kept in f32.
    mx = jnp.max(scores, axis=-1, keepdims=True)
    e = jnp.exp(scores - mx)
    attn = e / jnp.sum(e, axis=-1, keepdims=True)

    # V projection + weighted sum; bf16 MXU operands, f32 accumulation.
    v_proj = jnp.einsum("bsd,de->bse", v, wv,
                        preferred_element_type=jnp.float32).astype(jnp.bfloat16)
    out = lax.dot_general(
        attn.astype(jnp.bfloat16), v_proj,
        dimension_numbers=(((2,), (1,)), ((0,), (0,))),    # batched attn @ v
        preferred_element_type=jnp.float32)                # (BB, Sq, D)

    o_ref[...] = out.astype(o_ref.dtype)


def prepare_params(w_q, w_k, w_v):
    """One-time (setup) weight plumbing, amortized across calls:
       * fold the 1/sqrt(d_model) scale and the K projection into a single
         score matrix M = (1/sqrt(d)) * W_q^T @ W_k,
       * pre-transpose W_v for `x @ W` layout,
       * cast both to bf16 MXU-operand dtype (accumulation stays f32)."""
    d_model = w_k.shape[1]  # == k.size(col_dim)
    scale = 1.0 / jnp.sqrt(jnp.float32(d_model))
    m = (w_q.T @ w_k) * scale
    return m.astype(jnp.bfloat16), w_v.T.astype(jnp.bfloat16)


def attention_forward(enc_q, enc_k, enc_v, params, *, block_batch=8):
    """Forward pass. Accepts (seq, d_model) like the PyTorch module, or
    (batch, seq, d_model) to fuse many independent instances in one call."""
    m, wv_t = params
    squeeze = enc_q.ndim == 2
    if squeeze:
        enc_q, enc_k, enc_v = enc_q[None], enc_k[None], enc_v[None]

    batch, seq_q, d_model = enc_q.shape
    seq_k = enc_k.shape[1]

    bb = max(1, min(block_batch, batch))
    num_blocks = pl.cdiv(batch, bb)
    b_pad = num_blocks * bb
    if b_pad != batch:
        padz = lambda x: jnp.pad(x, ((0, b_pad - batch), (0, 0), (0, 0)))
        enc_q, enc_k, enc_v = padz(enc_q), padz(enc_k), padz(enc_v)

    q_spec = pl.BlockSpec((bb, seq_q, d_model), lambda i: (i, 0, 0))
    kv_spec = pl.BlockSpec((bb, seq_k, d_model), lambda i: (i, 0, 0))
    w_spec = pl.BlockSpec((d_model, d_model), lambda i: (0, 0))

    out = pl.pallas_call(
        _attention_kernel,
        out_shape=jax.ShapeDtypeStruct((b_pad, seq_q, d_model), jnp.float32),
        grid_spec=pltpu.PrefetchScalarGridSpec(
            num_scalar_prefetch=0,
            grid=(num_blocks,),
            in_specs=[q_spec, kv_spec, kv_spec, w_spec, w_spec],
            out_specs=pl.BlockSpec((bb, seq_q, d_model), lambda i: (i, 0, 0)),
        ),
        compiler_params=pltpu.CompilerParams(
            # Batch axis is independent -> shard across v7x's 2 TensorCores.
            dimension_semantics=("parallel",)),
    )(enc_q, enc_k, enc_v, m, wv_t)

    out = out[:batch]
    return out[0] if squeeze else out


def _reference(enc_q, enc_k, enc_v, w_q, w_k, w_v):
    q = enc_q @ w_q.T
    k = enc_k @ w_k.T
    v = enc_v @ w_v.T
    sims = q @ jnp.swapaxes(k, -1, -2)
    scaled = sims / jnp.sqrt(jnp.float32(w_k.shape[1]))
    attn = jax.nn.softmax(scaled, axis=-1)
    return attn @ v


if __name__ == "__main__":
    d_model = 32
    seq = 8
    batch = 8  # independent attention instances fused under one pallas_call

    key = jax.random.PRNGKey(0)
    k_q, k_k, k_v, k_wq, k_wk, k_wv = jax.random.split(key, 6)

    enc_q = jax.random.normal(k_q, (batch, seq, d_model), dtype=jnp.float32)
    enc_k = jax.random.normal(k_k, (batch, seq, d_model), dtype=jnp.float32)
    enc_v = jax.random.normal(k_v, (batch, seq, d_model), dtype=jnp.float32)

    # Deterministic nn.Linear-style init: U(-1/sqrt(in_features), 1/sqrt(in_features))
    bound = 1.0 / jnp.sqrt(jnp.float32(d_model))
    w_q = jax.random.uniform(k_wq, (d_model, d_model), jnp.float32, -bound, bound)
    w_k = jax.random.uniform(k_wk, (d_model, d_model), jnp.float32, -bound, bound)
    w_v = jax.random.uniform(k_wv, (d_model, d_model), jnp.float32, -bound, bound)

    params = prepare_params(w_q, w_k, w_v)  # setup-time, not per-call

    # Batched run: one pallas_call amortizes launch/DMA overhead over `batch`.
    out = attention_forward(enc_q, enc_k, enc_v, params, block_batch=8)
    out = jax.block_until_ready(out)

    ref = _reference(enc_q, enc_k, enc_v, w_q, w_k, w_v)
    assert out.shape == (batch, seq, d_model)
    # Tolerance accounts for bf16 MXU operands (f32 accumulation, f32 softmax).
    assert jnp.allclose(out, ref, atol=2e-2, rtol=2e-2), float(
        jnp.max(jnp.abs(out - ref)))

    # Single-instance call matching the PyTorch module's (seq, d_model) forward.
    out1 = jax.block_until_ready(
        attention_forward(enc_q[0], enc_k[0], enc_v[0], params))
    assert out1.shape == (seq, d_model)
    assert jnp.allclose(out1, ref[0], atol=2e-2, rtol=2e-2)

    print("KERNEL_OK")
</pallas_src>

<mosaic_0001>
module attributes {stable_mosaic.version = 11 : i64} {
  func.func @_attention_kernel(%arg0: i32, %arg1: memref<8x8x32xf32, #tpu.memory_space<vmem>>, %arg2: memref<8x8x32xf32, #tpu.memory_space<vmem>>, %arg3: memref<8x8x32xf32, #tpu.memory_space<vmem>>, %arg4: memref<32x32xbf16, #tpu.memory_space<vmem>>, %arg5: memref<32x32xbf16, #tpu.memory_space<vmem>>, %arg6: memref<8x8x32xf32, #tpu.memory_space<vmem>>) attributes {dimension_semantics = [#tpu.dimension_semantics<parallel>], iteration_bounds = array<i64: 1>, scalar_prefetch = 0 : i64, scratch_operands = 0 : i64, tpu.core_type = #tpu.core_type<tc>, window_params = [{transform_indices = @transform_0, window_bounds = array<i64: 8, 8, 32>}, {transform_indices = @transform_1, window_bounds = array<i64: 8, 8, 32>}, {transform_indices = @transform_2, window_bounds = array<i64: 8, 8, 32>}, {pipeline_mode = #tpu.pipeline_mode<synchronous>, transform_indices = @transform_3, window_bounds = array<i64: 32, 32>}, {pipeline_mode = #tpu.pipeline_mode<synchronous>, transform_indices = @transform_4, window_bounds = array<i64: 32, 32>}, {transform_indices = @transform_5, window_bounds = array<i64: 8, 8, 32>}]} {
    %c0 = arith.constant 0 : index
    %c0_0 = arith.constant 0 : index
    %c0_1 = arith.constant 0 : index
    %0 = vector.load %arg1[%c0, %c0_0, %c0_1] : memref<8x8x32xf32, #tpu.memory_space<vmem>>, vector<8x8x32xf32>
    %1 = arith.truncf %0 : vector<8x8x32xf32> to vector<8x8x32xbf16>
    %c0_2 = arith.constant 0 : index
    %c0_3 = arith.constant 0 : index
    %c0_4 = arith.constant 0 : index
    %2 = vector.load %arg2[%c0_2, %c0_3, %c0_4] : memref<8x8x32xf32, #tpu.memory_space<vmem>>, vector<8x8x32xf32>
    %3 = arith.truncf %2 : vector<8x8x32xf32> to vector<8x8x32xbf16>
    %c0_5 = arith.constant 0 : index
    %c0_6 = arith.constant 0 : index
    %c0_7 = arith.constant 0 : index
    %4 = vector.load %arg3[%c0_5, %c0_6, %c0_7] : memref<8x8x32xf32, #tpu.memory_space<vmem>>, vector<8x8x32xf32>
    %5 = arith.truncf %4 : vector<8x8x32xf32> to vector<8x8x32xbf16>
    %c0_8 = arith.constant 0 : index
    %c0_9 = arith.constant 0 : index
    %6 = vector.load %arg4[%c0_8, %c0_9] : memref<32x32xbf16, #tpu.memory_space<vmem>>, vector<32x32xbf16>
    %c0_10 = arith.constant 0 : index
    %c0_11 = arith.constant 0 : index
    %7 = vector.load %arg5[%c0_10, %c0_11] : memref<32x32xbf16, #tpu.memory_space<vmem>>, vector<32x32xbf16>
    "tpu.trace_start"() <{level = 10 : i32, message = "bqd,de->bqe"}> : () -> ()
    %cst = arith.constant dense<0.000000e+00> : vector<8x8x32xf32>
    %8 = tpu.matmul %1, %6, %cst {dimension_numbers = #tpu.dot_dimension_numbers<[2], [0], [0, 1], [1], [0, 0, 0, 1, 1, 1], [], []>} : vector<8x8x32xbf16>, vector<32x32xbf16>, vector<8x8x32xf32> -> vector<8x8x32xf32>
    "tpu.trace_stop"() : () -> ()
    %9 = arith.truncf %8 : vector<8x8x32xf32> to vector<8x8x32xbf16>
    %cst_12 = arith.constant dense<0.000000e+00> : vector<8x8x8xf32>
    %10 = tpu.matmul %9, %3, %cst_12 {dimension_numbers = #tpu.dot_dimension_numbers<[2], [2], [1], [1], [0, 0, 0, 1, 1, 1], [0], [0]>} : vector<8x8x32xbf16>, vector<8x8x32xbf16>, vector<8x8x8xf32> -> vector<8x8x8xf32>
    %cst_13 = arith.constant dense<0xFF800000> : vector<8x8xf32>
    %11 = vector.multi_reduction <maximumf>, %10, %cst_13 [2] : vector<8x8x8xf32> to vector<8x8xf32>
    %12 = vector.shape_cast %11 : vector<8x8xf32> to vector<8x8x1xf32>
    %13 = vector.broadcast %12 : vector<8x8x1xf32> to vector<8x8x8xf32>
    %14 = arith.subf %10, %13 : vector<8x8x8xf32>
    %15 = math.exp %14 : vector<8x8x8xf32>
    %cst_14 = arith.constant dense<0.000000e+00> : vector<8x8xf32>
    %16 = vector.multi_reduction <add>, %15, %cst_14 [2] : vector<8x8x8xf32> to vector<8x8xf32>
    %17 = vector.shape_cast %16 : vector<8x8xf32> to vector<8x8x1xf32>
    %18 = vector.broadcast %17 : vector<8x8x1xf32> to vector<8x8x8xf32>
    %19 = arith.divf %15, %18 : vector<8x8x8xf32>
    "tpu.trace_start"() <{level = 10 : i32, message = "bsd,de->bse"}> : () -> ()
    %cst_15 = arith.constant dense<0.000000e+00> : vector<8x8x32xf32>
    %20 = tpu.matmul %5, %7, %cst_15 {dimension_numbers = #tpu.dot_dimension_numbers<[2], [0], [0, 1], [1], [0, 0, 0, 1, 1, 1], [], []>} : vector<8x8x32xbf16>, vector<32x32xbf16>, vector<8x8x32xf32> -> vector<8x8x32xf32>
    "tpu.trace_stop"() : () -> ()
    %21 = arith.truncf %20 : vector<8x8x32xf32> to vector<8x8x32xbf16>
    %22 = arith.truncf %19 : vector<8x8x8xf32> to vector<8x8x8xbf16>
    %cst_16 = arith.constant dense<0.000000e+00> : vector<8x8x32xf32>
    %23 = tpu.matmul %22, %21, %cst_16 {dimension_numbers = #tpu.dot_dimension_numbers<[2], [1], [1], [2], [0, 0, 0, 1, 1, 2], [0], [0]>} : vector<8x8x8xbf16>, vector<8x8x32xbf16>, vector<8x8x32xf32> -> vector<8x8x32xf32>
    %c0_17 = arith.constant 0 : index
    %c0_18 = arith.constant 0 : index
    %c0_19 = arith.constant 0 : index
    %24 = vector.load %arg6[%c0_17, %c0_18, %c0_19] : memref<8x8x32xf32, #tpu.memory_space<vmem>>, vector<8x8x32xf32>
    tpu.vector_store %arg6[%c0_17, %c0_18, %c0_19], %23 {strides = array<i32>} : memref<8x8x32xf32, #tpu.memory_space<vmem>>, vector<8x8x32xf32>,
    return
  }
  func.func @transform_0(%arg0: i32) -> (i32, i32, i32) {
    %c0_i32 = arith.constant 0 : i32
    %c0_i32_0 = arith.constant 0 : i32
    %c0_i32_1 = arith.constant 0 : i32
    return %arg0, %c0_i32, %c0_i32_0 : i32, i32, i32
  }
  func.func @transform_1(%arg0: i32) -> (i32, i32, i32) {
    %c0_i32 = arith.constant 0 : i32
    %c0_i32_0 = arith.constant 0 : i32
    %c0_i32_1 = arith.constant 0 : i32
    return %arg0, %c0_i32, %c0_i32_0 : i32, i32, i32
  }
  func.func @transform_2(%arg0: i32) -> (i32, i32, i32) {
    %c0_i32 = arith.constant 0 : i32
    %c0_i32_0 = arith.constant 0 : i32
    %c0_i32_1 = arith.constant 0 : i32
    return %arg0, %c0_i32, %c0_i32_0 : i32, i32, i32
  }
  func.func @transform_3(%arg0: i32) -> (i32, i32) {
    %c0_i32 = arith.constant 0 : i32
    %c0_i32_0 = arith.constant 0 : i32
    %c0_i32_1 = arith.constant 0 : i32
    return %c0_i32, %c0_i32_0 : i32, i32
  }
  func.func @transform_4(%arg0: i32) -> (i32, i32) {
    %c0_i32 = arith.constant 0 : i32
    %c0_i32_0 = arith.constant 0 : i32
    %c0_i32_1 = arith.constant 0 : i32
    return %c0_i32, %c0_i32_0 : i32, i32
  }
  func.func @transform_5(%arg0: i32) -> (i32, i32, i32) {
    %c0_i32 = arith.constant 0 : i32
    %c0_i32_0 = arith.constant 0 : i32
    %c0_i32_1 = arith.constant 0 : i32
    return %arg0, %c0_i32, %c0_i32_0 : i32, i32, i32
  }
}

</mosaic_0001>

<llo_original>
// kernel: tpu_custom_call.1
$region0: #{tpu_custom_call.1}
  #allocation0 [shape = 'u32[]', space=smem, size = 0x4, offset = 0x4, fixed_abs, tag = 'smem constant byte address 0x4 - core index']
  #allocation1 [shape = 'u32[144,128]{1,0:T(1,128)}', space=vmem, size = 0x12000, scoped, tag = 'internal scratch']
  %s0 = inlined_call_operand.hbm [shape: f32[8,8,32], index: 0, kind: input, shape index: {}]
  %s1 = inlined_call_operand.hbm [shape: f32[8,8,32], index: 1, kind: input, shape index: {}]
  %s2 = inlined_call_operand.hbm [shape: f32[8,8,32], index: 2, kind: input, shape index: {}]
  %s3 = inlined_call_operand.hbm [shape: bf16[32,32], index: 3, kind: input, shape index: {}]
  %s4 = inlined_call_operand.hbm [shape: bf16[32,32], index: 4, kind: input, shape index: {}]
  %s5 = inlined_call_operand.hbm [shape: f32[8,8,32], index: 5, kind: output, shape index: {}]
  %s6 = sld [smem:[#allocation0]]
  $region50: #{tpu_custom_call.1} parent=0
    _
  %s8 = ssub.s32 1, %s6
  %s9 = scalar_select 0, %s8, %s6
  $region1: #{tpu_custom_call.1} parent=0
    #allocation2 [shape = 'u8[32768]{0}', space=vmem, size = 0x8000, scoped, tag = 'input window, operand 0, single buffered']
    #allocation3 [shape = 's32[1]{0}', space=sflag, size = 0x4, scoped, tag = 'scoped memory for tpu_custom_call.1']
    #allocation4 [shape = 's32[1]{0}', space=sflag, size = 0x4, scoped, tag = 'scoped memory for tpu_custom_call.1']
    #allocation5 [shape = 'u8[32768]{0}', space=vmem, size = 0x8000, scoped, tag = 'input window, operand 1, single buffered']
    #allocation6 [shape = 's32[1]{0}', space=sflag, size = 0x4, scoped, tag = 'scoped memory for tpu_custom_call.1']
    #allocation7 [shape = 'u8[32768]{0}', space=vmem, size = 0x8000, scoped, tag = 'input window, operand 2, single buffered']
    #allocation8 [shape = 'u8[8192]{0}', space=vmem, size = 0x2000, scoped, tag = 'input window, operand 3, single buffered']
    #allocation9 [shape = 's32[1]{0}', space=sflag, size = 0x4, scoped, tag = 'scoped memory for tpu_custom_call.1']
    #allocation10 [shape = 'u8[8192]{0}', space=vmem, size = 0x2000, scoped, tag = 'input window, operand 4, single buffered']
    #allocation11 [shape = 'u8[32768]{0}', space=vmem, size = 0x8000, scoped, tag = 'output window, operand 0, single buffered']
    %10 = vsyncpa [#allocation3], 0
    %11 = vsyncpa [#allocation6], 0
    %12 = vsyncpa [#allocation9], 0
    %13 = vsyncpa [#allocation4], 0
    // Predicated region
    $region2: #{tpu_custom_call.1} parent=1 // pred_check
      _
    $region3: #{tpu_custom_call.1} parent=1 // pred_check_branch
      %15 = sbr.rel (0) target = $region5
    $region4: #{tpu_custom_call.1} parent=1 // pred_region
      %s17 = ssub.s32 1024, 1024
      %18 = vsyncadd [#allocation3], %s17
      %s19 = sshll.u32 [#allocation2], 4
      %s20 = int_to_ptr.vmem [resolvable:$true] %s19
      %25 = dma.hbm_to_vmem [thread:$0]  %s0, 1024, %s20, [#allocation3], 128, 128, 8
    $region5: #{tpu_custom_call.1} parent=1 // pred_fallthru
      _
    // Predicated region
    $region6: #{tpu_custom_call.1} parent=1 // pred_check
      _
    $region7: #{tpu_custom_call.1} parent=1 // pred_check_branch
      %27 = sbr.rel (0) target = $region9
    $region8: #{tpu_custom_call.1} parent=1 // pred_region
      %s29 = ssub.s32 1024, 1024
      %30 = vsyncadd [#allocation6], %s29
      %s31 = sshll.u32 [#allocation5], 4
      %s32 = int_to_ptr.vmem [resolvable:$true] %s31
      %37 = dma.hbm_to_vmem [thread:$0]  %s1, 1024, %s32, [#allocation6], 128, 128, 8
    $region9: #{tpu_custom_call.1} parent=1 // pred_fallthru
      _
    // Predicated region
    $region10: #{tpu_custom_call.1} parent=1 // pred_check
      _
    $region11: #{tpu_custom_call.1} parent=1 // pred_check_branch
      %39 = sbr.rel (0) target = $region13
    $region12: #{tpu_custom_call.1} parent=1 // pred_region
      %s41 = ssub.s32 1024, 1024
      %42 = vsyncadd [#allocation6], %s41
      %s43 = sshll.u32 [#allocation7], 4
      %s44 = int_to_ptr.vmem [resolvable:$true] %s43
      %49 = dma.hbm_to_vmem [thread:$0]  %s2, 1024, %s44, [#allocation6], 128, 128, 8
    $region13: #{tpu_custom_call.1} parent=1 // pred_fallthru
      _
    // Predicated region
    $region14: #{tpu_custom_call.1} parent=1 // pred_check
      _
    $region15: #{tpu_custom_call.1} parent=1 // pred_check_branch
      %51 = sbr.rel (0) target = $region17
    $region16: #{tpu_custom_call.1} parent=1 // pred_region
      %s53 = ssub.s32 256, 256
      %54 = vsyncadd [#allocation9], %s53
      %s55 = sshll.u32 [#allocation8], 4
      %s56 = int_to_ptr.vmem [resolvable:$true] %s55
      %61 = dma.hbm_to_vmem [thread:$0]  %s3, 256, %s56, [#allocation9], 64, 64, 4
    $region17: #{tpu_custom_call.1} parent=1 // pred_fallthru
      _
    // Predicated region
    $region18: #{tpu_custom_call.1} parent=1 // pred_check
      _
    $region19: #{tpu_custom_call.1} parent=1 // pred_check_branch
      %63 = sbr.rel (0) target = $region21
    $region20: #{tpu_custom_call.1} parent=1 // pred_region
      %s65 = ssub.s32 256, 256
      %66 = vsyncadd [#allocation9], %s65
      %s67 = sshll.u32 [#allocation10], 4
      %s68 = int_to_ptr.vmem [resolvable:$true] %s67
      %73 = dma.hbm_to_vmem [thread:$0]  %s4, 256, %s68, [#allocation9], 64, 64, 4
    $region21: #{tpu_custom_call.1} parent=1 // pred_fallthru
      _
    // Predicated region
    $region22: #{tpu_custom_call.1} parent=1 // pred_check
      _
    $region23: #{tpu_custom_call.1} parent=1 // pred_check_branch
      %75 = sbr.rel (0) target = $region25
    $region24: #{tpu_custom_call.1} parent=1 // pred_region
      %76 = dma.done [#allocation3], 1024
    $region25: #{tpu_custom_call.1} parent=1 // pred_fallthru
      _
    // Predicated region
    $region26: #{tpu_custom_call.1} parent=1 // pred_check
      _
    $region27: #{tpu_custom_call.1} parent=1 // pred_check_branch
      %78 = sbr.rel (0) target = $region29
    $region28: #{tpu_custom_call.1} parent=1 // pred_region
      %79 = dma.done [#allocation6], 1024
    $region29: #{tpu_custom_call.1} parent=1 // pred_fallthru
      _
    // Predicated region
    $region30: #{tpu_custom_call.1} parent=1 // pred_check
      _
    $region31: #{tpu_custom_call.1} parent=1 // pred_check_branch
      %81 = sbr.rel (0) target = $region33
    $region32: #{tpu_custom_call.1} parent=1 // pred_region
      %82 = dma.done [#allocation6], 1024
    $region33: #{tpu_custom_call.1} parent=1 // pred_fallthru
      _
    // Predicated region
    $region34: #{tpu_custom_call.1} parent=1 // pred_check
      _
    $region35: #{tpu_custom_call.1} parent=1 // pred_check_branch
      %84 = sbr.rel (0) target = $region37
    $region36: #{tpu_custom_call.1} parent=1 // pred_region
      %85 = dma.done [#allocation9], 256
    $region37: #{tpu_custom_call.1} parent=1 // pred_fallthru
      _
    // Predicated region
    $region38: #{tpu_custom_call.1} parent=1 // pred_check
      _
    $region39: #{tpu_custom_call.1} parent=1 // pred_check_branch
      %87 = sbr.rel (0) target = $region41
    $region40: #{tpu_custom_call.1} parent=1 // pred_region
      %88 = dma.done [#allocation9], 256
    $region41: #{tpu_custom_call.1} parent=1 // pred_fallthru
      _
    %v90 = vld [vmem:[#allocation2] sm:$0xff]
    %v91 = vld [vmem:[#allocation2 + $0x8] sm:$0xff]
    %v92 = vld [vmem:[#allocation2 + $0x10] sm:$0xff]
    %v93 = vld [vmem:[#allocation2 + $0x18] sm:$0xff]
    %v94 = vld [vmem:[#allocation2 + $0x20] sm:$0xff]
    %v95 = vld [vmem:[#allocation2 + $0x28] sm:$0xff]
    %v96 = vld [vmem:[#allocation2 + $0x30] sm:$0xff]
    %v97 = vld [vmem:[#allocation2 + $0x38] sm:$0xff]
    %v98 = vpack.c.bf16 %v90, %v90
    %v99 = vpack.c.bf16 %v91, %v91
    %v100 = vpack.c.bf16 %v92, %v92
    %v101 = vpack.c.bf16 %v93, %v93
    %v102 = vpack.c.bf16 %v94, %v94
    %v103 = vpack.c.bf16 %v95, %v95
    %v104 = vpack.c.bf16 %v96, %v96
    %v105 = vpack.c.bf16 %v97, %v97
    %v106 = vld [vmem:[#allocation5] sm:$0xff]
    %v107 = vld [vmem:[#allocation5 + $0x8] sm:$0xff]
    %v108 = vld [vmem:[#allocation5 + $0x10] sm:$0xff]
    %v109 = vld [vmem:[#allocation5 + $0x18] sm:$0xff]
    %v110 = vld [vmem:[#allocation5 + $0x20] sm:$0xff]
    %v111 = vld [vmem:[#allocation5 + $0x28] sm:$0xff]
    %v112 = vld [vmem:[#allocation5 + $0x30] sm:$0xff]
    %v113 = vld [vmem:[#allocation5 + $0x38] sm:$0xff]
    %v114 = vpack.c.bf16 %v106, %v106
    %v115 = vpack.c.bf16 %v107, %v107
    %v116 = vpack.c.bf16 %v108, %v108
    %v117 = vpack.c.bf16 %v109, %v109
    %v118 = vpack.c.bf16 %v110, %v110
    %v119 = vpack.c.bf16 %v111, %v111
    %v120 = vpack.c.bf16 %v112, %v112
    %v121 = vpack.c.bf16 %v113, %v113
    %v122 = vld [vmem:[#allocation7] sm:$0xff]
    %v123 = vld [vmem:[#allocation7 + $0x8] sm:$0xff]
    %v124 = vld [vmem:[#allocation7 + $0x10] sm:$0xff]
    %v125 = vld [vmem:[#allocation7 + $0x18] sm:$0xff]
    %v126 = vld [vmem:[#allocation7 + $0x20] sm:$0xff]
    %v127 = vld [vmem:[#allocation7 + $0x28] sm:$0xff]
    %v128 = vld [vmem:[#allocation7 + $0x30] sm:$0xff]
    %v129 = vld [vmem:[#allocation7 + $0x38] sm:$0xff]
    %v130 = vpack.c.bf16 %v122, %v122
    %v131 = vpack.c.bf16 %v123, %v123
    %v132 = vpack.c.bf16 %v124, %v124
    %v133 = vpack.c.bf16 %v125, %v125
    %v134 = vpack.c.bf16 %v126, %v126
    %v135 = vpack.c.bf16 %v127, %v127
    %v136 = vpack.c.bf16 %v128, %v128
    %v137 = vpack.c.bf16 %v129, %v129
    %v138 = vld [vmem:[#allocation8] sm:$0xf]
    %v139 = vld [vmem:[#allocation8 + $0x4] sm:$0xf]
    %v140 = vld [vmem:[#allocation8 + $0x8] sm:$0xf]
    %v141 = vld [vmem:[#allocation8 + $0xc] sm:$0xf]
    %v142 = vld [vmem:[#allocation10] sm:$0xf]
    %v143 = vld [vmem:[#allocation10 + $0x4] sm:$0xf]
    %v144 = vld [vmem:[#allocation10 + $0x8] sm:$0xf]
    %v145 = vld [vmem:[#allocation10 + $0xc] sm:$0xf]
    %v154 = vunpack.c.l.b16 %v98
    %v155 = vunpack.c.l.b16 %v99
    %v156 = vunpack.c.l.b16 %v100
    %v157 = vunpack.c.l.b16 %v101
    %v158 = vunpack.c.l.b16 %v102
    %v159 = vunpack.c.l.b16 %v103
    %v160 = vunpack.c.l.b16 %v104
    %v161 = vunpack.c.l.b16 %v105
    %v162 = vpack.c.b16 %v155, %v154
    %v163 = vpack.c.b16 %v157, %v156
    %v164 = vpack.c.b16 %v159, %v158
    %v165 = vpack.c.b16 %v161, %v160
    %v170 = vunpack.c.l.b16 %v138
    %v171 = vunpack.c.l.b16 %v139
    %v172 = vunpack.c.l.b16 %v140
    %v173 = vunpack.c.l.b16 %v141
    %v174 = vpack.c.b16 %v171, %v170
    %v175 = vpack.c.b16 %v173, %v172
    %vm178 = vcmask 261120
    %v180 = vsel %vm178, %v162, 0
    %v183 = vsel %vm178, %v163, 0
    %v186 = vsel %vm178, %v164, 0
    %v189 = vsel %vm178, %v165, 0
    %191 = vmatprep.subr.bf16.mxu0 0
    %192 = vmatpush1.bf16.msra.mxu0 0
    %193 = vmatprep.subr.bf16.mxu0 0
    %194 = vmatpush1.bf16.msra.mxu0 0
    %195 = vmatprep.subr.bf16.mxu0 0
    %196 = vmatpush1.bf16.msra.mxu0 0
    %197 = vmatprep.subr.bf16.mxu0 0
    %198 = vmatpush1.bf16.msra.mxu0 0
    %199 = vmatprep.subr.bf16.mxu0 0
    %200 = vmatpush1.bf16.msra.mxu0 0
    %201 = vmatprep.subr.bf16.mxu0 0
    %202 = vmatpush1.bf16.msra.mxu0 0
    %203 = vmatprep.subr.bf16.mxu0 0
    %204 = vmatpush1.bf16.msra.mxu0 %v175
    %205 = vmatprep.subr.bf16.mxu0 0
    %206 = vmatpush1.bf16.msra.mxu0 %v174
    %207 = vmatprep.subr.bf16.mxu0 0
    %208 = vmatpush2.bf16.msra.mxu0 0
    %209 = vmatprep.subr.bf16.mxu0 0
    %210 = vmatpush2.bf16.msra.mxu0 0
    %211 = vmatprep.subr.bf16.mxu0 0
    %212 = vmatpush2.bf16.msra.mxu0 0
    %213 = vmatprep.subr.bf16.mxu0 0
    %214 = vmatpush2.bf16.msra.mxu0 0
    %215 = vmatprep.subr.bf16.mxu0 0
    %216 = vmatpush2.bf16.msra.mxu0 0
    %217 = vmatprep.subr.bf16.mxu0 0
    %218 = vmatpush2.bf16.msra.mxu0 0
    %219 = vmatprep.subr.bf16.mxu0 0
    %220 = vmatpush2.bf16.msra.mxu0 0
    %221 = vmatprep.subr.bf16.mxu0 0
    %222 = vmatpush2.bf16.msra.mxu0 0
    %223 = vmatprep.mubr.bf16.mxu0 0
    %224 = vmatmul.mubr.bf16.gmra.mxu0 %v180
    %v225 = vpop.f32.mrf.mxu0
    %v226 = vadd.f32 0.0, %v225
    %v227 = vpop.f32.mrf.mxu0
    %v228 = vpop.f32.mrf.mxu0
    %v229 = vadd.f32 0.0, %v228
    %v230 = vpop.f32.mrf.mxu0
    %231 = vmatprep.mubr.bf16.mxu0 0
    %232 = vmatmul.mubr.bf16.gmra.mxu0 %v183
    %v233 = vpop.f32.mrf.mxu0
    %v234 = vadd.f32 0.0, %v233
    %v235 = vpop.f32.mrf.mxu0
    %v236 = vpop.f32.mrf.mxu0
    %v237 = vadd.f32 0.0, %v236
    %v238 = vpop.f32.mrf.mxu0
    %239 = vmatprep.mubr.bf16.mxu0 0
    %240 = vmatmul.mubr.bf16.gmra.mxu0 %v186
    %v241 = vpop.f32.mrf.mxu0
    %v242 = vadd.f32 0.0, %v241
    %v243 = vpop.f32.mrf.mxu0
    %v244 = vpop.f32.mrf.mxu0
    %v245 = vadd.f32 0.0, %v244
    %v246 = vpop.f32.mrf.mxu0
    %247 = vmatprep.mubr.bf16.mxu0 0
    %248 = vmatmul.mubr.bf16.gmra.mxu0 %v189
    %v249 = vpop.f32.mrf.mxu0
    %v250 = vadd.f32 0.0, %v249
    %v251 = vpop.f32.mrf.mxu0
    %v252 = vpop.f32.mrf.mxu0
    %v253 = vadd.f32 0.0, %v252
    %v254 = vpop.f32.mrf.mxu0
    %255 = vdwg.mxu0
    %v256 = vpack.c.bf16 %v226, %v226
    %v257 = vpack.c.bf16 %v229, %v229
    %v258 = vpack.c.bf16 %v234, %v234
    %v259 = vpack.c.bf16 %v237, %v237
    %v260 = vpack.c.bf16 %v242, %v242
    %v261 = vpack.c.bf16 %v245, %v245
    %v262 = vpack.c.bf16 %v250, %v250
    %v263 = vpack.c.bf16 %v253, %v253
    %v265 = vsel %vm178, %v256, 0
    %v268 = vsel %vm178, %v114, 0
    %270 = vmatprep.subr.bf16.mxu0 0
    %271 = vmatpush1.bf16.xpose.msra.mxu0 0
    %272 = vmatprep.subr.bf16.mxu0 0
    %273 = vmatpush1.bf16.xpose.msra.mxu0 0
    %274 = vmatprep.subr.bf16.mxu0 0
    %275 = vmatpush1.bf16.xpose.msra.mxu0 0
    %276 = vmatprep.subr.bf16.mxu0 0
    %277 = vmatpush1.bf16.xpose.msra.mxu0 0
    %278 = vmatprep.subr.bf16.mxu0 0
    %279 = vmatpush1.bf16.xpose.msra.mxu0 0
    %280 = vmatprep.subr.bf16.mxu0 0
    %281 = vmatpush1.bf16.xpose.msra.mxu0 0
    %282 = vmatprep.subr.bf16.mxu0 0
    %283 = vmatpush1.bf16.xpose.msra.mxu0 0
    %284 = vmatprep.subr.bf16.mxu0 0
    %285 = vmatpush1.bf16.xpose.msra.mxu0 %v268
    %286 = vmatprep.subr.bf16.mxu0 0
    %287 = vmatpush2.bf16.xpose.msra.mxu0 0
    %288 = vmatprep.subr.bf16.mxu0 0
    %289 = vmatpush2.bf16.xpose.msra.mxu0 0
    %290 = vmatprep.subr.bf16.mxu0 0
    %291 = vmatpush2.bf16.xpose.msra.mxu0 0
    %292 = vmatprep.subr.bf16.mxu0 0
    %293 = vmatpush2.bf16.xpose.msra.mxu0 0
    %294 = vmatprep.subr.bf16.mxu0 0
    %295 = vmatpush2.bf16.xpose.msra.mxu0 0
    %296 = vmatprep.subr.bf16.mxu0 0
    %297 = vmatpush2.bf16.xpose.msra.mxu0 0
    %298 = vmatprep.subr.bf16.mxu0 0
    %299 = vmatpush2.bf16.xpose.msra.mxu0 0
    %300 = vmatprep.subr.bf16.mxu0 0
    %301 = vmatpush2.bf16.xpose.msra.mxu0 0
    %302 = vmatprep.mubr.bf16.mxu0 0
    %303 = vmatmul.mubr.bf16.gmra.mxu0 %v265
    %v304 = vpop.f32.mrf.mxu0
    %v305 = vadd.f32 0.0, %v304
    %v306 = vpop.f32.mrf.mxu0
    %v307 = vpop.f32.mrf.mxu0
    %v308 = vpop.f32.mrf.mxu0
    %309 = vdwg.mxu0
    %v311 = vsel %vm178, %v257, 0
    %v314 = vsel %vm178, %v115, 0
    %316 = vmatprep.subr.bf16.mxu0 0
    %317 = vmatpush1.bf16.xpose.msra.mxu0 0
    %318 = vmatprep.subr.bf16.mxu0 0
    %319 = vmatpush1.bf16.xpose.msra.mxu0 0
    %320 = vmatprep.subr.bf16.mxu0 0
    %321 = vmatpush1.bf16.xpose.msra.mxu0 0
    %322 = vmatprep.subr.bf16.mxu0 0
    %323 = vmatpush1.bf16.xpose.msra.mxu0 0
    %324 = vmatprep.subr.bf16.mxu0 0
    %325 = vmatpush1.bf16.xpose.msra.mxu0 0
    %326 = vmatprep.subr.bf16.mxu0 0
    %327 = vmatpush1.bf16.xpose.msra.mxu0 0
    %328 = vmatprep.subr.bf16.mxu0 0
    %329 = vmatpush1.bf16.xpose.msra.mxu0 0
    %330 = vmatprep.subr.bf16.mxu0 0
    %331 = vmatpush1.bf16.xpose.msra.mxu0 %v314
    %332 = vmatprep.subr.bf16.mxu0 0
    %333 = vmatpush2.bf16.xpose.msra.mxu0 0
    %334 = vmatprep.subr.bf16.mxu0 0
    %335 = vmatpush2.bf16.xpose.msra.mxu0 0
    %336 = vmatprep.subr.bf16.mxu0 0
    %337 = vmatpush2.bf16.xpose.msra.mxu0 0
    %338 = vmatprep.subr.bf16.mxu0 0
    %339 = vmatpush2.bf16.xpose.msra.mxu0 0
    %340 = vmatprep.subr.bf16.mxu0 0
    %341 = vmatpush2.bf16.xpose.msra.mxu0 0
    %342 = vmatprep.subr.bf16.mxu0 0
    %343 = vmatpush2.bf16.xpose.msra.mxu0 0
    %344 = vmatprep.subr.bf16.mxu0 0
    %345 = vmatpush2.bf16.xpose.msra.mxu0 0
    %346 = vmatprep.subr.bf16.mxu0 0
    %347 = vmatpush2.bf16.xpose.msra.mxu0 0
    %348 = vmatprep.mubr.bf16.mxu0 0
    %349 = vmatmul.mubr.bf16.gmra.mxu0 %v311
    %v350 = vpop.f32.mrf.mxu0
    %v351 = vadd.f32 0.0, %v350
    %v352 = vpop.f32.mrf.mxu0
    %v353 = vpop.f32.mrf.mxu0
    %v354 = vpop.f32.mrf.mxu0
    %355 = vdwg.mxu0
    %v357 = vsel %vm178, %v258, 0
    %v360 = vsel %vm178, %v116, 0
    %362 = vmatprep.subr.bf16.mxu0 0
    %363 = vmatpush1.bf16.xpose.msra.mxu0 0
    %364 = vmatprep.subr.bf16.mxu0 0
    %365 = vmatpush1.bf16.xpose.msra.mxu0 0
    %366 = vmatprep.subr.bf16.mxu0 0
    %367 = vmatpush1.bf16.xpose.msra.mxu0 0
    %368 = vmatprep.subr.bf16.mxu0 0
    %369 = vmatpush1.bf16.xpose.msra.mxu0 0
    %370 = vmatprep.subr.bf16.mxu0 0
    %371 = vmatpush1.bf16.xpose.msra.mxu0 0
    %372 = vmatprep.subr.bf16.mxu0 0
    %373 = vmatpush1.bf16.xpose.msra.mxu0 0
    %374 = vmatprep.subr.bf16.mxu0 0
    %375 = vmatpush1.bf16.xpose.msra.mxu0 0
    %376 = vmatprep.subr.bf16.mxu0 0
    %377 = vmatpush1.bf16.xpose.msra.mxu0 %v360
    %378 = vmatprep.subr.bf16.mxu0 0
    %379 = vmatpush2.bf16.xpose.msra.mxu0 0
    %380 = vmatprep.subr.bf16.mxu0 0
    %381 = vmatpush2.bf16.xpose.msra.mxu0 0
    %382 = vmatprep.subr.bf16.mxu0 0
    %383 = vmatpush2.bf16.xpose.msra.mxu0 0
    %384 = vmatprep.subr.bf16.mxu0 0
    %385 = vmatpush2.bf16.xpose.msra.mxu0 0
    %386 = vmatprep.subr.bf16.mxu0 0
    %387 = vmatpush2.bf16.xpose.msra.mxu0 0
    %388 = vmatprep.subr.bf16.mxu0 0
    %389 = vmatpush2.bf16.xpose.msra.mxu0 0
    %390 = vmatprep.subr.bf16.mxu0 0
    %391 = vmatpush2.bf16.xpose.msra.mxu0 0
    %392 = vmatprep.subr.bf16.mxu0 0
    %393 = vmatpush2.bf16.xpose.msra.mxu0 0
    %394 = vmatprep.mubr.bf16.mxu0 0
    %395 = vmatmul.mubr.bf16.gmra.mxu0 %v357
    %v396 = vpop.f32.mrf.mxu0
    %v397 = vadd.f32 0.0, %v396
    %v398 = vpop.f32.mrf.mxu0
    %v399 = vpop.f32.mrf.mxu0
    %v400 = vpop.f32.mrf.mxu0
    %401 = vdwg.mxu0
    %v403 = vsel %vm178, %v259, 0
    %v406 = vsel %vm178, %v117, 0
    %408 = vmatprep.subr.bf16.mxu0 0
    %409 = vmatpush1.bf16.xpose.msra.mxu0 0
    %410 = vmatprep.subr.bf16.mxu0 0
    %411 = vmatpush1.bf16.xpose.msra.mxu0 0
    %412 = vmatprep.subr.bf16.mxu0 0
    %413 = vmatpush1.bf16.xpose.msra.mxu0 0
    %414 = vmatprep.subr.bf16.mxu0 0
    %415 = vmatpush1.bf16.xpose.msra.mxu0 0
    %416 = vmatprep.subr.bf16.mxu0 0
    %417 = vmatpush1.bf16.xpose.msra.mxu0 0
    %418 = vmatprep.subr.bf16.mxu0 0
    %419 = vmatpush1.bf16.xpose.msra.mxu0 0
    %420 = vmatprep.subr.bf16.mxu0 0
    %421 = vmatpush1.bf16.xpose.msra.mxu0 0
    %422 = vmatprep.subr.bf16.mxu0 0
    %423 = vmatpush1.bf16.xpose.msra.mxu0 %v406
    %424 = vmatprep.subr.bf16.mxu0 0
    %425 = vmatpush2.bf16.xpose.msra.mxu0 0
    %426 = vmatprep.subr.bf16.mxu0 0
    %427 = vmatpush2.bf16.xpose.msra.mxu0 0
    %428 = vmatprep.subr.bf16.mxu0 0
    %429 = vmatpush2.bf16.xpose.msra.mxu0 0
    %430 = vmatprep.subr.bf16.mxu0 0
    %431 = vmatpush2.bf16.xpose.msra.mxu0 0
    %432 = vmatprep.subr.bf16.mxu0 0
    %433 = vmatpush2.bf16.xpose.msra.mxu0 0
    %434 = vmatprep.subr.bf16.mxu0 0
    %435 = vmatpush2.bf16.xpose.msra.mxu0 0
    %436 = vmatprep.subr.bf16.mxu0 0
    %437 = vmatpush2.bf16.xpose.msra.mxu0 0
    %438 = vmatprep.subr.bf16.mxu0 0
    %439 = vmatpush2.bf16.xpose.msra.mxu0 0
    %440 = vmatprep.mubr.bf16.mxu0 0
    %441 = vmatmul.mubr.bf16.gmra.mxu0 %v403
    %v442 = vpop.f32.mrf.mxu0
    %v443 = vadd.f32 0.0, %v442
    %v444 = vpop.f32.mrf.mxu0
    %v445 = vpop.f32.mrf.mxu0
    %v446 = vpop.f32.mrf.mxu0
    %447 = vdwg.mxu0
    %v449 = vsel %vm178, %v260, 0
    %v452 = vsel %vm178, %v118, 0
    %454 = vmatprep.subr.bf16.mxu0 0
    %455 = vmatpush1.bf16.xpose.msra.mxu0 0
    %456 = vmatprep.subr.bf16.mxu0 0
    %457 = vmatpush1.bf16.xpose.msra.mxu0 0
    %458 = vmatprep.subr.bf16.mxu0 0
    %459 = vmatpush1.bf16.xpose.msra.mxu0 0
    %460 = vmatprep.subr.bf16.mxu0 0
    %461 = vmatpush1.bf16.xpose.msra.mxu0 0
    %462 = vmatprep.subr.bf16.mxu0 0
    %463 = vmatpush1.bf16.xpose.msra.mxu0 0
    %464 = vmatprep.subr.bf16.mxu0 0
    %465 = vmatpush1.bf16.xpose.msra.mxu0 0
    %466 = vmatprep.subr.bf16.mxu0 0
    %467 = vmatpush1.bf16.xpose.msra.mxu0 0
    %468 = vmatprep.subr.bf16.mxu0 0
    %469 = vmatpush1.bf16.xpose.msra.mxu0 %v452
    %470 = vmatprep.subr.bf16.mxu0 0
    %471 = vmatpush2.bf16.xpose.msra.mxu0 0
    %472 = vmatprep.subr.bf16.mxu0 0
    %473 = vmatpush2.bf16.xpose.msra.mxu0 0
    %474 = vmatprep.subr.bf16.mxu0 0
    %475 = vmatpush2.bf16.xpose.msra.mxu0 0
    %476 = vmatprep.subr.bf16.mxu0 0
    %477 = vmatpush2.bf16.xpose.msra.mxu0 0
    %478 = vmatprep.subr.bf16.mxu0 0
    %479 = vmatpush2.bf16.xpose.msra.mxu0 0
    %480 = vmatprep.subr.bf16.mxu0 0
    %481 = vmatpush2.bf16.xpose.msra.mxu0 0
    %482 = vmatprep.subr.bf16.mxu0 0
    %483 = vmatpush2.bf16.xpose.msra.mxu0 0
    %484 = vmatprep.subr.bf16.mxu0 0
    %485 = vmatpush2.bf16.xpose.msra.mxu0 0
    %486 = vmatprep.mubr.bf16.mxu0 0
    %487 = vmatmul.mubr.bf16.gmra.mxu0 %v449
    %v488 = vpop.f32.mrf.mxu0
    %v489 = vadd.f32 0.0, %v488
    %v490 = vpop.f32.mrf.mxu0
    %v491 = vpop.f32.mrf.mxu0
    %v492 = vpop.f32.mrf.mxu0
    %493 = vdwg.mxu0
    %v495 = vsel %vm178, %v261, 0
    %v498 = vsel %vm178, %v119, 0
    %500 = vmatprep.subr.bf16.mxu0 0
    %501 = vmatpush1.bf16.xpose.msra.mxu0 0
    %502 = vmatprep.subr.bf16.mxu0 0
    %503 = vmatpush1.bf16.xpose.msra.mxu0 0
    %504 = vmatprep.subr.bf16.mxu0 0
    %505 = vmatpush1.bf16.xpose.msra.mxu0 0
    %506 = vmatprep.subr.bf16.mxu0 0
    %507 = vmatpush1.bf16.xpose.msra.mxu0 0
    %508 = vmatprep.subr.bf16.mxu0 0
    %509 = vmatpush1.bf16.xpose.msra.mxu0 0
    %510 = vmatprep.subr.bf16.mxu0 0
    %511 = vmatpush1.bf16.xpose.msra.mxu0 0
    %512 = vmatprep.subr.bf16.mxu0 0
    %513 = vmatpush1.bf16.xpose.msra.mxu0 0
    %514 = vmatprep.subr.bf16.mxu0 0
    %515 = vmatpush1.bf16.xpose.msra.mxu0 %v498
    %516 = vmatprep.subr.bf16.mxu0 0
    %517 = vmatpush2.bf16.xpose.msra.mxu0 0
    %518 = vmatprep.subr.bf16.mxu0 0
    %519 = vmatpush2.bf16.xpose.msra.mxu0 0
    %520 = vmatprep.subr.bf16.mxu0 0
    %521 = vmatpush2.bf16.xpose.msra.mxu0 0
    %522 = vmatprep.subr.bf16.mxu0 0
    %523 = vmatpush2.bf16.xpose.msra.mxu0 0
    %524 = vmatprep.subr.bf16.mxu0 0
    %525 = vmatpush2.bf16.xpose.msra.mxu0 0
    %526 = vmatprep.subr.bf16.mxu0 0
    %527 = vmatpush2.bf16.xpose.msra.mxu0 0
    %528 = vmatprep.subr.bf16.mxu0 0
    %529 = vmatpush2.bf16.xpose.msra.mxu0 0
    %530 = vmatprep.subr.bf16.mxu0 0
    %531 = vmatpush2.bf16.xpose.msra.mxu0 0
    %532 = vmatprep.mubr.bf16.mxu0 0
    %533 = vmatmul.mubr.bf16.gmra.mxu0 %v495
    %v534 = vpop.f32.mrf.mxu0
    %v535 = vadd.f32 0.0, %v534
    %v536 = vpop.f32.mrf.mxu0
    %v537 = vpop.f32.mrf.mxu0
    %v538 = vpop.f32.mrf.mxu0
    %539 = vdwg.mxu0
    %v541 = vsel %vm178, %v262, 0
    %v544 = vsel %vm178, %v120, 0
    %546 = vmatprep.subr.bf16.mxu0 0
    %547 = vmatpush1.bf16.xpose.msra.mxu0 0
    %548 = vmatprep.subr.bf16.mxu0 0
    %549 = vmatpush1.bf16.xpose.msra.mxu0 0
    %550 = vmatprep.subr.bf16.mxu0 0
    %551 = vmatpush1.bf16.xpose.msra.mxu0 0
    %552 = vmatprep.subr.bf16.mxu0 0
    %553 = vmatpush1.bf16.xpose.msra.mxu0 0
    %554 = vmatprep.subr.bf16.mxu0 0
    %555 = vmatpush1.bf16.xpose.msra.mxu0 0
    %556 = vmatprep.subr.bf16.mxu0 0
    %557 = vmatpush1.bf16.xpose.msra.mxu0 0
    %558 = vmatprep.subr.bf16.mxu0 0
    %559 = vmatpush1.bf16.xpose.msra.mxu0 0
    %560 = vmatprep.subr.bf16.mxu0 0
    %561 = vmatpush1.bf16.xpose.msra.mxu0 %v544
    %562 = vmatprep.subr.bf16.mxu0 0
    %563 = vmatpush2.bf16.xpose.msra.mxu0 0
    %564 = vmatprep.subr.bf16.mxu0 0
    %565 = vmatpush2.bf16.xpose.msra.mxu0 0
    %566 = vmatprep.subr.bf16.mxu0 0
    %567 = vmatpush2.bf16.xpose.msra.mxu0 0
    %568 = vmatprep.subr.bf16.mxu0 0
    %569 = vmatpush2.bf16.xpose.msra.mxu0 0
    %570 = vmatprep.subr.bf16.mxu0 0
    %571 = vmatpush2.bf16.xpose.msra.mxu0 0
    %572 = vmatprep.subr.bf16.mxu0 0
    %573 = vmatpush2.bf16.xpose.msra.mxu0 0
    %574 = vmatprep.subr.bf16.mxu0 0
    %575 = vmatpush2.bf16.xpose.msra.mxu0 0
    %576 = vmatprep.subr.bf16.mxu0 0
    %577 = vmatpush2.bf16.xpose.msra.mxu0 0
    %578 = vmatprep.mubr.bf16.mxu0 0
    %579 = vmatmul.mubr.bf16.gmra.mxu0 %v541
    %v580 = vpop.f32.mrf.mxu0
    %v581 = vadd.f32 0.0, %v580
    %v582 = vpop.f32.mrf.mxu0
    %v583 = vpop.f32.mrf.mxu0
    %v584 = vpop.f32.mrf.mxu0
    %585 = vdwg.mxu0
    %v587 = vsel %vm178, %v263, 0
    %v590 = vsel %vm178, %v121, 0
    %592 = vmatprep.subr.bf16.mxu0 0
    %593 = vmatpush1.bf16.xpose.msra.mxu0 0
    %594 = vmatprep.subr.bf16.mxu0 0
    %595 = vmatpush1.bf16.xpose.msra.mxu0 0
    %596 = vmatprep.subr.bf16.mxu0 0
    %597 = vmatpush1.bf16.xpose.msra.mxu0 0
    %598 = vmatprep.subr.bf16.mxu0 0
    %599 = vmatpush1.bf16.xpose.msra.mxu0 0
    %600 = vmatprep.subr.bf16.mxu0 0
    %601 = vmatpush1.bf16.xpose.msra.mxu0 0
    %602 = vmatprep.subr.bf16.mxu0 0
    %603 = vmatpush1.bf16.xpose.msra.mxu0 0
    %604 = vmatprep.subr.bf16.mxu0 0
    %605 = vmatpush1.bf16.xpose.msra.mxu0 0
    %606 = vmatprep.subr.bf16.mxu0 0
    %607 = vmatpush1.bf16.xpose.msra.mxu0 %v590
    %608 = vmatprep.subr.bf16.mxu0 0
    %609 = vmatpush2.bf16.xpose.msra.mxu0 0
    %610 = vmatprep.subr.bf16.mxu0 0
    %611 = vmatpush2.bf16.xpose.msra.mxu0 0
    %612 = vmatprep.subr.bf16.mxu0 0
    %613 = vmatpush2.bf16.xpose.msra.mxu0 0
    %614 = vmatprep.subr.bf16.mxu0 0
    %615 = vmatpush2.bf16.xpose.msra.mxu0 0
    %616 = vmatprep.subr.bf16.mxu0 0
    %617 = vmatpush2.bf16.xpose.msra.mxu0 0
    %618 = vmatprep.subr.bf16.mxu0 0
    %619 = vmatpush2.bf16.xpose.msra.mxu0 0
    %620 = vmatprep.subr.bf16.mxu0 0
    %621 = vmatpush2.bf16.xpose.msra.mxu0 0
    %622 = vmatprep.subr.bf16.mxu0 0
    %623 = vmatpush2.bf16.xpose.msra.mxu0 0
    %624 = vmatprep.mubr.bf16.mxu0 0
    %625 = vmatmul.mubr.bf16.gmra.mxu0 %v587
    %v626 = vpop.f32.mrf.mxu0
    %v627 = vadd.f32 0.0, %v626
    %v628 = vpop.f32.mrf.mxu0
    %v629 = vpop.f32.mrf.mxu0
    %v630 = vpop.f32.mrf.mxu0
    %631 = vdwg.mxu0
    %vm632 = vcmask 64512
    %v633 = vsel %vm632, %v305, -inf
    %634 = vmax.xlane.f32.xlu0 %v633
    %v635 = vpop.xlane.xlu0 %634
    %v636 = vsel %vm632, %v351, -inf
    %637 = vmax.xlane.f32.xlu0 %v636
    %v638 = vpop.xlane.xlu0 %637
    %v639 = vsel %vm632, %v397, -inf
    %640 = vmax.xlane.f32.xlu0 %v639
    %v641 = vpop.xlane.xlu0 %640
    %v642 = vsel %vm632, %v443, -inf
    %643 = vmax.xlane.f32.xlu0 %v642
    %v644 = vpop.xlane.xlu0 %643
    %v645 = vsel %vm632, %v489, -inf
    %646 = vmax.xlane.f32.xlu0 %v645
    %v647 = vpop.xlane.xlu0 %646
    %v648 = vsel %vm632, %v535, -inf
    %649 = vmax.xlane.f32.xlu0 %v648
    %v650 = vpop.xlane.xlu0 %649
    %v651 = vsel %vm632, %v581, -inf
    %652 = vmax.xlane.f32.xlu0 %v651
    %v653 = vpop.xlane.xlu0 %652
    %v654 = vsel %vm632, %v627, -inf
    %655 = vmax.xlane.f32.xlu0 %v654
    %v656 = vpop.xlane.xlu0 %655
    %v657 = vsub.f32 %v305, %v635
    %v658 = vsub.f32 %v351, %v638
    %v659 = vsub.f32 %v397, %v641
    %v660 = vsub.f32 %v443, %v644
    %v661 = vsub.f32 %v489, %v647
    %v662 = vsub.f32 %v535, %v650
    %v663 = vsub.f32 %v581, %v653
    %v664 = vsub.f32 %v627, %v656
    %v665 = vmul.f32 %v657, 1.442695
    %v666 = vpow.pop %v665
    %v667 = vmul.f32 %v658, 1.442695
    %v668 = vpow.pop %v667
    %v669 = vmul.f32 %v659, 1.442695
    %v670 = vpow.pop %v669
    %v671 = vmul.f32 %v660, 1.442695
    %v672 = vpow.pop %v671
    %v673 = vmul.f32 %v661, 1.442695
    %v674 = vpow.pop %v673
    %v675 = vmul.f32 %v662, 1.442695
    %v676 = vpow.pop %v675
    %v677 = vmul.f32 %v663, 1.442695
    %v678 = vpow.pop %v677
    %v679 = vmul.f32 %v664, 1.442695
    %v680 = vpow.pop %v679
    %v681 = vsel %vm632, %v666, 0.0
    %682 = vadd.xlane.f32.xlu0 %v681
    %v683 = vpop.xlane.xlu0 %682
    %v684 = vsel %vm632, %v668, 0.0
    %685 = vadd.xlane.f32.xlu0 %v684
    %v686 = vpop.xlane.xlu0 %685
    %v687 = vsel %vm632, %v670, 0.0
    %688 = vadd.xlane.f32.xlu0 %v687
    %v689 = vpop.xlane.xlu0 %688
    %v690 = vsel %vm632, %v672, 0.0
    %691 = vadd.xlane.f32.xlu0 %v690
    %v692 = vpop.xlane.xlu0 %691
    %v693 = vsel %vm632, %v674, 0.0
    %694 = vadd.xlane.f32.xlu0 %v693
    %v695 = vpop.xlane.xlu0 %694
    %v696 = vsel %vm632, %v676, 0.0
    %697 = vadd.xlane.f32.xlu0 %v696
    %v698 = vpop.xlane.xlu0 %697
    %v699 = vsel %vm632, %v678, 0.0
    %700 = vadd.xlane.f32.xlu0 %v699
    %v701 = vpop.xlane.xlu0 %700
    %v702 = vsel %vm632, %v680, 0.0
    %703 = vadd.xlane.f32.xlu0 %v702
    %v704 = vpop.xlane.xlu0 %703
    %v705 = vrcp.pop %v683
    %v706 = vmul.f32 %v666, %v705
    %v707 = vrcp.pop %v686
    %v708 = vmul.f32 %v668, %v707
    %v709 = vrcp.pop %v689
    %v710 = vmul.f32 %v670, %v709
    %v711 = vrcp.pop %v692
    %v712 = vmul.f32 %v672, %v711
    %v713 = vrcp.pop %v695
    %v714 = vmul.f32 %v674, %v713
    %v715 = vrcp.pop %v698
    %v716 = vmul.f32 %v676, %v715
    %v717 = vrcp.pop %v701
    %v718 = vmul.f32 %v678, %v717
    %v719 = vrcp.pop %v704
    %v720 = vmul.f32 %v680, %v719
    %v729 = vunpack.c.l.b16 %v130
    %v730 = vunpack.c.l.b16 %v131
    %v731 = vunpack.c.l.b16 %v132
    %v732 = vunpack.c.l.b16 %v133
    %v733 = vunpack.c.l.b16 %v134
    %v734 = vunpack.c.l.b16 %v135
    %v735 = vunpack.c.l.b16 %v136
    %v736 = vunpack.c.l.b16 %v137
    %v737 = vpack.c.b16 %v730, %v729
    %v738 = vpack.c.b16 %v732, %v731
    %v739 = vpack.c.b16 %v734, %v733
    %v740 = vpack.c.b16 %v736, %v735
    %v745 = vunpack.c.l.b16 %v142
    %v746 = vunpack.c.l.b16 %v143
    %v747 = vunpack.c.l.b16 %v144
    %v748 = vunpack.c.l.b16 %v145
    %v749 = vpack.c.b16 %v746, %v745
    %v750 = vpack.c.b16 %v748, %v747
    %v754 = vsel %vm178, %v737, 0
    %v757 = vsel %vm178, %v738, 0
    %v760 = vsel %vm178, %v739, 0
    %v763 = vsel %vm178, %v740, 0
    %765 = vmatprep.subr.bf16.mxu0 0
    %766 = vmatpush1.bf16.msra.mxu0 0
    %767 = vmatprep.subr.bf16.mxu0 0
    %768 = vmatpush1.bf16.msra.mxu0 0
    %769 = vmatprep.subr.bf16.mxu0 0
    %770 = vmatpush1.bf16.msra.mxu0 0
    %771 = vmatprep.subr.bf16.mxu0 0
    %772 = vmatpush1.bf16.msra.mxu0 0
    %773 = vmatprep.subr.bf16.mxu0 0
    %774 = vmatpush1.bf16.msra.mxu0 0
    %775 = vmatprep.subr.bf16.mxu0 0
    %776 = vmatpush1.bf16.msra.mxu0 0
    %777 = vmatprep.subr.bf16.mxu0 0
    %778 = vmatpush1.bf16.msra.mxu0 %v750
    %779 = vmatprep.subr.bf16.mxu0 0
    %780 = vmatpush1.bf16.msra.mxu0 %v749
    %781 = vmatprep.subr.bf16.mxu0 0
    %782 = vmatpush2.bf16.msra.mxu0 0
    %783 = vmatprep.subr.bf16.mxu0 0
    %784 = vmatpush2.bf16.msra.mxu0 0
    %785 = vmatprep.subr.bf16.mxu0 0
    %786 = vmatpush2.bf16.msra.mxu0 0
    %787 = vmatprep.subr.bf16.mxu0 0
    %788 = vmatpush2.bf16.msra.mxu0 0
    %789 = vmatprep.subr.bf16.mxu0 0
    %790 = vmatpush2.bf16.msra.mxu0 0
    %791 = vmatprep.subr.bf16.mxu0 0
    %792 = vmatpush2.bf16.msra.mxu0 0
    %793 = vmatprep.subr.bf16.mxu0 0
    %794 = vmatpush2.bf16.msra.mxu0 0
    %795 = vmatprep.subr.bf16.mxu0 0
    %796 = vmatpush2.bf16.msra.mxu0 0
    %797 = vmatprep.mubr.bf16.mxu0 0
    %798 = vmatmul.mubr.bf16.gmra.mxu0 %v754
    %v799 = vpop.f32.mrf.mxu0
    %v800 = vadd.f32 0.0, %v799
    %v801 = vpop.f32.mrf.mxu0
    %v802 = vpop.f32.mrf.mxu0
    %v803 = vadd.f32 0.0, %v802
    %v804 = vpop.f32.mrf.mxu0
    %805 = vmatprep.mubr.bf16.mxu0 0
    %806 = vmatmul.mubr.bf16.gmra.mxu0 %v757
    %v807 = vpop.f32.mrf.mxu0
    %v808 = vadd.f32 0.0, %v807
    %v809 = vpop.f32.mrf.mxu0
    %v810 = vpop.f32.mrf.mxu0
    %v811 = vadd.f32 0.0, %v810
    %v812 = vpop.f32.mrf.mxu0
    %813 = vmatprep.mubr.bf16.mxu0 0
    %814 = vmatmul.mubr.bf16.gmra.mxu0 %v760
    %v815 = vpop.f32.mrf.mxu0
    %v816 = vadd.f32 0.0, %v815
    %v817 = vpop.f32.mrf.mxu0
    %v818 = vpop.f32.mrf.mxu0
    %v819 = vadd.f32 0.0, %v818
    %v820 = vpop.f32.mrf.mxu0
    %821 = vmatprep.mubr.bf16.mxu0 0
    %822 = vmatmul.mubr.bf16.gmra.mxu0 %v763
    %v823 = vpop.f32.mrf.mxu0
    %v824 = vadd.f32 0.0, %v823
    %v825 = vpop.f32.mrf.mxu0
    %v826 = vpop.f32.mrf.mxu0
    %v827 = vadd.f32 0.0, %v826
    %v828 = vpop.f32.mrf.mxu0
    %829 = vdwg.mxu0
    %v830 = vpack.c.bf16 %v800, %v800
    %v831 = vpack.c.bf16 %v803, %v803
    %v832 = vpack.c.bf16 %v808, %v808
    %v833 = vpack.c.bf16 %v811, %v811
    %v834 = vpack.c.bf16 %v816, %v816
    %v835 = vpack.c.bf16 %v819, %v819
    %v836 = vpack.c.bf16 %v824, %v824
    %v837 = vpack.c.bf16 %v827, %v827
    %v838 = vpack.c.bf16 %v706, %v706
    %v839 = vpack.c.bf16 %v708, %v708
    %v840 = vpack.c.bf16 %v710, %v710
    %v841 = vpack.c.bf16 %v712, %v712
    %v842 = vpack.c.bf16 %v714, %v714
    %v843 = vpack.c.bf16 %v716, %v716
    %v844 = vpack.c.bf16 %v718, %v718
    %v845 = vpack.c.bf16 %v720, %v720
    %v847 = vsel %vm632, %v838, 0
    %vm849 = vcmask 1043456
    %v851 = vsel %vm849, %v830, 0
    %853 = vmatprep.subr.bf16.mxu0 0
    %854 = vmatpush1.bf16.msra.mxu0 0
    %855 = vmatprep.subr.bf16.mxu0 0
    %856 = vmatpush1.bf16.msra.mxu0 0
    %857 = vmatprep.subr.bf16.mxu0 0
    %858 = vmatpush1.bf16.msra.mxu0 0
    %859 = vmatprep.subr.bf16.mxu0 0
    %860 = vmatpush1.bf16.msra.mxu0 0
    %861 = vmatprep.subr.bf16.mxu0 0
    %862 = vmatpush1.bf16.msra.mxu0 0
    %863 = vmatprep.subr.bf16.mxu0 0
    %864 = vmatpush1.bf16.msra.mxu0 0
    %865 = vmatprep.subr.bf16.mxu0 0
    %866 = vmatpush1.bf16.msra.mxu0 0
    %867 = vmatprep.subr.bf16.mxu0 0
    %868 = vmatpush1.bf16.msra.mxu0 %v851
    %869 = vmatprep.subr.bf16.mxu0 0
    %870 = vmatpush2.bf16.msra.mxu0 0
    %871 = vmatprep.subr.bf16.mxu0 0
    %872 = vmatpush2.bf16.msra.mxu0 0
    %873 = vmatprep.subr.bf16.mxu0 0
    %874 = vmatpush2.bf16.msra.mxu0 0
    %875 = vmatprep.subr.bf16.mxu0 0
    %876 = vmatpush2.bf16.msra.mxu0 0
    %877 = vmatprep.subr.bf16.mxu0 0
    %878 = vmatpush2.bf16.msra.mxu0 0
    %879 = vmatprep.subr.bf16.mxu0 0
    %880 = vmatpush2.bf16.msra.mxu0 0
    %881 = vmatprep.subr.bf16.mxu0 0
    %882 = vmatpush2.bf16.msra.mxu0 0
    %883 = vmatprep.subr.bf16.mxu0 0
    %884 = vmatpush2.bf16.msra.mxu0 0
    %885 = vmatprep.mubr.bf16.mxu0 0
    %886 = vmatmul.mubr.bf16.gmra.mxu0 %v847
    %v887 = vpop.f32.mrf.mxu0
    %v888 = vadd.f32 0.0, %v887
    %v889 = vpop.f32.mrf.mxu0
    %v890 = vpop.f32.mrf.mxu0
    %v891 = vpop.f32.mrf.mxu0
    %892 = vdwg.mxu0
    %v894 = vsel %vm632, %v839, 0
    %v897 = vsel %vm849, %v831, 0
    %899 = vmatprep.subr.bf16.mxu0 0
    %900 = vmatpush1.bf16.msra.mxu0 0
    %901 = vmatprep.subr.bf16.mxu0 0
    %902 = vmatpush1.bf16.msra.mxu0 0
    %903 = vmatprep.subr.bf16.mxu0 0
    %904 = vmatpush1.bf16.msra.mxu0 0
    %905 = vmatprep.subr.bf16.mxu0 0
    %906 = vmatpush1.bf16.msra.mxu0 0
    %907 = vmatprep.subr.bf16.mxu0 0
    %908 = vmatpush1.bf16.msra.mxu0 0
    %909 = vmatprep.subr.bf16.mxu0 0
    %910 = vmatpush1.bf16.msra.mxu0 0
    %911 = vmatprep.subr.bf16.mxu0 0
    %912 = vmatpush1.bf16.msra.mxu0 0
    %913 = vmatprep.subr.bf16.mxu0 0
    %914 = vmatpush1.bf16.msra.mxu0 %v897
    %915 = vmatprep.subr.bf16.mxu0 0
    %916 = vmatpush2.bf16.msra.mxu0 0
    %917 = vmatprep.subr.bf16.mxu0 0
    %918 = vmatpush2.bf16.msra.mxu0 0
    %919 = vmatprep.subr.bf16.mxu0 0
    %920 = vmatpush2.bf16.msra.mxu0 0
    %921 = vmatprep.subr.bf16.mxu0 0
    %922 = vmatpush2.bf16.msra.mxu0 0
    %923 = vmatprep.subr.bf16.mxu0 0
    %924 = vmatpush2.bf16.msra.mxu0 0
    %925 = vmatprep.subr.bf16.mxu0 0
    %926 = vmatpush2.bf16.msra.mxu0 0
    %927 = vmatprep.subr.bf16.mxu0 0
    %928 = vmatpush2.bf16.msra.mxu0 0
    %929 = vmatprep.subr.bf16.mxu0 0
    %930 = vmatpush2.bf16.msra.mxu0 0
    %931 = vmatprep.mubr.bf16.mxu0 0
    %932 = vmatmul.mubr.bf16.gmra.mxu0 %v894
    %v933 = vpop.f32.mrf.mxu0
    %v934 = vadd.f32 0.0, %v933
    %v935 = vpop.f32.mrf.mxu0
    %v936 = vpop.f32.mrf.mxu0
    %v937 = vpop.f32.mrf.mxu0
    %938 = vdwg.mxu0
    %v940 = vsel %vm632, %v840, 0
    %v943 = vsel %vm849, %v832, 0
    %945 = vmatprep.subr.bf16.mxu0 0
    %946 = vmatpush1.bf16.msra.mxu0 0
    %947 = vmatprep.subr.bf16.mxu0 0
    %948 = vmatpush1.bf16.msra.mxu0 0
    %949 = vmatprep.subr.bf16.mxu0 0
    %950 = vmatpush1.bf16.msra.mxu0 0
    %951 = vmatprep.subr.bf16.mxu0 0
    %952 = vmatpush1.bf16.msra.mxu0 0
    %953 = vmatprep.subr.bf16.mxu0 0
    %954 = vmatpush1.bf16.msra.mxu0 0
    %955 = vmatprep.subr.bf16.mxu0 0
    %956 = vmatpush1.bf16.msra.mxu0 0
    %957 = vmatprep.subr.bf16.mxu0 0
    %958 = vmatpush1.bf16.msra.mxu0 0
    %959 = vmatprep.subr.bf16.mxu0 0
    %960 = vmatpush1.bf16.msra.mxu0 %v943
    %961 = vmatprep.subr.bf16.mxu0 0
    %962 = vmatpush2.bf16.msra.mxu0 0
    %963 = vmatprep.subr.bf16.mxu0 0
    %964 = vmatpush2.bf16.msra.mxu0 0
    %965 = vmatprep.subr.bf16.mxu0 0
    %966 = vmatpush2.bf16.msra.mxu0 0
    %967 = vmatprep.subr.bf16.mxu0 0
    %968 = vmatpush2.bf16.msra.mxu0 0
    %969 = vmatprep.subr.bf16.mxu0 0
    %970 = vmatpush2.bf16.msra.mxu0 0
    %971 = vmatprep.subr.bf16.mxu0 0
    %972 = vmatpush2.bf16.msra.mxu0 0
    %973 = vmatprep.subr.bf16.mxu0 0
    %974 = vmatpush2.bf16.msra.mxu0 0
    %975 = vmatprep.subr.bf16.mxu0 0
    %976 = vmatpush2.bf16.msra.mxu0 0
    %977 = vmatprep.mubr.bf16.mxu0 0
    %978 = vmatmul.mubr.bf16.gmra.mxu0 %v940
    %v979 = vpop.f32.mrf.mxu0
    %v980 = vadd.f32 0.0, %v979
    %v981 = vpop.f32.mrf.mxu0
    %v982 = vpop.f32.mrf.mxu0
    %v983 = vpop.f32.mrf.mxu0
    %984 = vdwg.mxu0
    %v986 = vsel %vm632, %v841, 0
    %v989 = vsel %vm849, %v833, 0
    %991 = vmatprep.subr.bf16.mxu0 0
    %992 = vmatpush1.bf16.msra.mxu0 0
    %993 = vmatprep.subr.bf16.mxu0 0
    %994 = vmatpush1.bf16.msra.mxu0 0
    %995 = vmatprep.subr.bf16.mxu0 0
    %996 = vmatpush1.bf16.msra.mxu0 0
    %997 = vmatprep.subr.bf16.mxu0 0
    %998 = vmatpush1.bf16.msra.mxu0 0
    %999 = vmatprep.subr.bf16.mxu0 0
    %1000 = vmatpush1.bf16.msra.mxu0 0
    %1001 = vmatprep.subr.bf16.mxu0 0
    %1002 = vmatpush1.bf16.msra.mxu0 0
    %1003 = vmatprep.subr.bf16.mxu0 0
    %1004 = vmatpush1.bf16.msra.mxu0 0
    %1005 = vmatprep.subr.bf16.mxu0 0
    %1006 = vmatpush1.bf16.msra.mxu0 %v989
    %1007 = vmatprep.subr.bf16.mxu0 0
    %1008 = vmatpush2.bf16.msra.mxu0 0
    %1009 = vmatprep.subr.bf16.mxu0 0
    %1010 = vmatpush2.bf16.msra.mxu0 0
    %1011 = vmatprep.subr.bf16.mxu0 0
    %1012 = vmatpush2.bf16.msra.mxu0 0
    %1013 = vmatprep.subr.bf16.mxu0 0
    %1014 = vmatpush2.bf16.msra.mxu0 0
    %1015 = vmatprep.subr.bf16.mxu0 0
    %1016 = vmatpush2.bf16.msra.mxu0 0
    %1017 = vmatprep.subr.bf16.mxu0 0
    %1018 = vmatpush2.bf16.msra.mxu0 0
    %1019 = vmatprep.subr.bf16.mxu0 0
    %1020 = vmatpush2.bf16.msra.mxu0 0
    %1021 = vmatprep.subr.bf16.mxu0 0
    %1022 = vmatpush2.bf16.msra.mxu0 0
    %1023 = vmatprep.mubr.bf16.mxu0 0
    %1024 = vmatmul.mubr.bf16.gmra.mxu0 %v986
    %v1025 = vpop.f32.mrf.mxu0
    %v1026 = vadd.f32 0.0, %v1025
    %v1027 = vpop.f32.mrf.mxu0
    %v1028 = vpop.f32.mrf.mxu0
    %v1029 = vpop.f32.mrf.mxu0
    %1030 = vdwg.mxu0
    %v1032 = vsel %vm632, %v842, 0
    %v1035 = vsel %vm849, %v834, 0
    %1037 = vmatprep.subr.bf16.mxu0 0
    %1038 = vmatpush1.bf16.msra.mxu0 0
    %1039 = vmatprep.subr.bf16.mxu0 0
    %1040 = vmatpush1.bf16.msra.mxu0 0
    %1041 = vmatprep.subr.bf16.mxu0 0
    %1042 = vmatpush1.bf16.msra.mxu0 0
    %1043 = vmatprep.subr.bf16.mxu0 0
    %1044 = vmatpush1.bf16.msra.mxu0 0
    %1045 = vmatprep.subr.bf16.mxu0 0
    %1046 = vmatpush1.bf16.msra.mxu0 0
    %1047 = vmatprep.subr.bf16.mxu0 0
    %1048 = vmatpush1.bf16.msra.mxu0 0
    %1049 = vmatprep.subr.bf16.mxu0 0
    %1050 = vmatpush1.bf16.msra.mxu0 0
    %1051 = vmatprep.subr.bf16.mxu0 0
    %1052 = vmatpush1.bf16.msra.mxu0 %v1035
    %1053 = vmatprep.subr.bf16.mxu0 0
    %1054 = vmatpush2.bf16.msra.mxu0 0
    %1055 = vmatprep.subr.bf16.mxu0 0
    %1056 = vmatpush2.bf16.msra.mxu0 0
    %1057 = vmatprep.subr.bf16.mxu0 0
    %1058 = vmatpush2.bf16.msra.mxu0 0
    %1059 = vmatprep.subr.bf16.mxu0 0
    %1060 = vmatpush2.bf16.msra.mxu0 0
    %1061 = vmatprep.subr.bf16.mxu0 0
    %1062 = vmatpush2.bf16.msra.mxu0 0
    %1063 = vmatprep.subr.bf16.mxu0 0
    %1064 = vmatpush2.bf16.msra.mxu0 0
    %1065 = vmatprep.subr.bf16.mxu0 0
    %1066 = vmatpush2.bf16.msra.mxu0 0
    %1067 = vmatprep.subr.bf16.mxu0 0
    %1068 = vmatpush2.bf16.msra.mxu0 0
    %1069 = vmatprep.mubr.bf16.mxu0 0
    %1070 = vmatmul.mubr.bf16.gmra.mxu0 %v1032
    %v1071 = vpop.f32.mrf.mxu0
    %v1072 = vadd.f32 0.0, %v1071
    %v1073 = vpop.f32.mrf.mxu0
    %v1074 = vpop.f32.mrf.mxu0
    %v1075 = vpop.f32.mrf.mxu0
    %1076 = vdwg.mxu0
    %v1078 = vsel %vm632, %v843, 0
    %v1081 = vsel %vm849, %v835, 0
    %1083 = vmatprep.subr.bf16.mxu0 0
    %1084 = vmatpush1.bf16.msra.mxu0 0
    %1085 = vmatprep.subr.bf16.mxu0 0
    %1086 = vmatpush1.bf16.msra.mxu0 0
    %1087 = vmatprep.subr.bf16.mxu0 0
    %1088 = vmatpush1.bf16.msra.mxu0 0
    %1089 = vmatprep.subr.bf16.mxu0 0
    %1090 = vmatpush1.bf16.msra.mxu0 0
    %1091 = vmatprep.subr.bf16.mxu0 0
    %1092 = vmatpush1.bf16.msra.mxu0 0
    %1093 = vmatprep.subr.bf16.mxu0 0
    %1094 = vmatpush1.bf16.msra.mxu0 0
    %1095 = vmatprep.subr.bf16.mxu0 0
    %1096 = vmatpush1.bf16.msra.mxu0 0
    %1097 = vmatprep.subr.bf16.mxu0 0
    %1098 = vmatpush1.bf16.msra.mxu0 %v1081
    %1099 = vmatprep.subr.bf16.mxu0 0
    %1100 = vmatpush2.bf16.msra.mxu0 0
    %1101 = vmatprep.subr.bf16.mxu0 0
    %1102 = vmatpush2.bf16.msra.mxu0 0
    %1103 = vmatprep.subr.bf16.mxu0 0
    %1104 = vmatpush2.bf16.msra.mxu0 0
    %1105 = vmatprep.subr.bf16.mxu0 0
    %1106 = vmatpush2.bf16.msra.mxu0 0
    %1107 = vmatprep.subr.bf16.mxu0 0
    %1108 = vmatpush2.bf16.msra.mxu0 0
    %1109 = vmatprep.subr.bf16.mxu0 0
    %1110 = vmatpush2.bf16.msra.mxu0 0
    %1111 = vmatprep.subr.bf16.mxu0 0
    %1112 = vmatpush2.bf16.msra.mxu0 0
    %1113 = vmatprep.subr.bf16.mxu0 0
    %1114 = vmatpush2.bf16.msra.mxu0 0
    %1115 = vmatprep.mubr.bf16.mxu0 0
    %1116 = vmatmul.mubr.bf16.gmra.mxu0 %v1078
    %v1117 = vpop.f32.mrf.mxu0
    %v1118 = vadd.f32 0.0, %v1117
    %v1119 = vpop.f32.mrf.mxu0
    %v1120 = vpop.f32.mrf.mxu0
    %v1121 = vpop.f32.mrf.mxu0
    %1122 = vdwg.mxu0
    %v1124 = vsel %vm632, %v844, 0
    %v1127 = vsel %vm849, %v836, 0
    %1129 = vmatprep.subr.bf16.mxu0 0
    %1130 = vmatpush1.bf16.msra.mxu0 0
    %1131 = vmatprep.subr.bf16.mxu0 0
    %1132 = vmatpush1.bf16.msra.mxu0 0
    %1133 = vmatprep.subr.bf16.mxu0 0
    %1134 = vmatpush1.bf16.msra.mxu0 0
    %1135 = vmatprep.subr.bf16.mxu0 0
    %1136 = vmatpush1.bf16.msra.mxu0 0
    %1137 = vmatprep.subr.bf16.mxu0 0
    %1138 = vmatpush1.bf16.msra.mxu0 0
    %1139 = vmatprep.subr.bf16.mxu0 0
    %1140 = vmatpush1.bf16.msra.mxu0 0
    %1141 = vmatprep.subr.bf16.mxu0 0
    %1142 = vmatpush1.bf16.msra.mxu0 0
    %1143 = vmatprep.subr.bf16.mxu0 0
    %1144 = vmatpush1.bf16.msra.mxu0 %v1127
    %1145 = vmatprep.subr.bf16.mxu0 0
    %1146 = vmatpush2.bf16.msra.mxu0 0
    %1147 = vmatprep.subr.bf16.mxu0 0
    %1148 = vmatpush2.bf16.msra.mxu0 0
    %1149 = vmatprep.subr.bf16.mxu0 0
    %1150 = vmatpush2.bf16.msra.mxu0 0
    %1151 = vmatprep.subr.bf16.mxu0 0
    %1152 = vmatpush2.bf16.msra.mxu0 0
    %1153 = vmatprep.subr.bf16.mxu0 0
    %1154 = vmatpush2.bf16.msra.mxu0 0
    %1155 = vmatprep.subr.bf16.mxu0 0
    %1156 = vmatpush2.bf16.msra.mxu0 0
    %1157 = vmatprep.subr.bf16.mxu0 0
    %1158 = vmatpush2.bf16.msra.mxu0 0
    %1159 = vmatprep.subr.bf16.mxu0 0
    %1160 = vmatpush2.bf16.msra.mxu0 0
    %1161 = vmatprep.mubr.bf16.mxu0 0
    %1162 = vmatmul.mubr.bf16.gmra.mxu0 %v1124
    %v1163 = vpop.f32.mrf.mxu0
    %v1164 = vadd.f32 0.0, %v1163
    %v1165 = vpop.f32.mrf.mxu0
    %v1166 = vpop.f32.mrf.mxu0
    %v1167 = vpop.f32.mrf.mxu0
    %1168 = vdwg.mxu0
    %v1170 = vsel %vm632, %v845, 0
    %v1173 = vsel %vm849, %v837, 0
    %1175 = vmatprep.subr.bf16.mxu0 0
    %1176 = vmatpush1.bf16.msra.mxu0 0
    %1177 = vmatprep.subr.bf16.mxu0 0
    %1178 = vmatpush1.bf16.msra.mxu0 0
    %1179 = vmatprep.subr.bf16.mxu0 0
    %1180 = vmatpush1.bf16.msra.mxu0 0
    %1181 = vmatprep.subr.bf16.mxu0 0
    %1182 = vmatpush1.bf16.msra.mxu0 0
    %1183 = vmatprep.subr.bf16.mxu0 0
    %1184 = vmatpush1.bf16.msra.mxu0 0
    %1185 = vmatprep.subr.bf16.mxu0 0
    %1186 = vmatpush1.bf16.msra.mxu0 0
    %1187 = vmatprep.subr.bf16.mxu0 0
    %1188 = vmatpush1.bf16.msra.mxu0 0
    %1189 = vmatprep.subr.bf16.mxu0 0
    %1190 = vmatpush1.bf16.msra.mxu0 %v1173
    %1191 = vmatprep.subr.bf16.mxu0 0
    %1192 = vmatpush2.bf16.msra.mxu0 0
    %1193 = vmatprep.subr.bf16.mxu0 0
    %1194 = vmatpush2.bf16.msra.mxu0 0
    %1195 = vmatprep.subr.bf16.mxu0 0
    %1196 = vmatpush2.bf16.msra.mxu0 0
    %1197 = vmatprep.subr.bf16.mxu0 0
    %1198 = vmatpush2.bf16.msra.mxu0 0
    %1199 = vmatprep.subr.bf16.mxu0 0
    %1200 = vmatpush2.bf16.msra.mxu0 0
    %1201 = vmatprep.subr.bf16.mxu0 0
    %1202 = vmatpush2.bf16.msra.mxu0 0
    %1203 = vmatprep.subr.bf16.mxu0 0
    %1204 = vmatpush2.bf16.msra.mxu0 0
    %1205 = vmatprep.subr.bf16.mxu0 0
    %1206 = vmatpush2.bf16.msra.mxu0 0
    %1207 = vmatprep.mubr.bf16.mxu0 0
    %1208 = vmatmul.mubr.bf16.gmra.mxu0 %v1170
    %v1209 = vpop.f32.mrf.mxu0
    %v1210 = vadd.f32 0.0, %v1209
    %v1211 = vpop.f32.mrf.mxu0
    %v1212 = vpop.f32.mrf.mxu0
    %v1213 = vpop.f32.mrf.mxu0
    %1214 = vdwg.mxu0
    %1215 = vst.msk [vmem:[#allocation11] sm:$0xff] %vm178, %v888
    %1216 = vst.msk [vmem:[#allocation11 + $0x8] sm:$0xff] %vm178, %v934
    %1217 = vst.msk [vmem:[#allocation11 + $0x10] sm:$0xff] %vm178, %v980
    %1218 = vst.msk [vmem:[#allocation11 + $0x18] sm:$0xff] %vm178, %v1026
    %1219 = vst.msk [vmem:[#allocation11 + $0x20] sm:$0xff] %vm178, %v1072
    %1220 = vst.msk [vmem:[#allocation11 + $0x28] sm:$0xff] %vm178, %v1118
    %1221 = vst.msk [vmem:[#allocation11 + $0x30] sm:$0xff] %vm178, %v1164
    %1222 = vst.msk [vmem:[#allocation11 + $0x38] sm:$0xff] %vm178, %v1210
    // Predicated region
    $region42: #{tpu_custom_call.1} parent=1 // pred_check
      _
    $region43: #{tpu_custom_call.1} parent=1 // pred_check_branch
      %1224 = sbr.rel (0) target = $region45
    $region44: #{tpu_custom_call.1} parent=1 // pred_region
      %s1226 = ssub.s32 1024, 1024
      %1227 = vsyncadd [#allocation4], %s1226
      %s1228 = sshll.u32 [#allocation11], 4
      %s1229 = int_to_ptr.vmem [resolvable:$true] %s1228
      %1234 = dma.vmem_to_hbm [thread:$0]  %s1229, 1024, %s5, [#allocation4], 128, 128, 8
    $region45: #{tpu_custom_call.1} parent=1 // pred_fallthru
      _
    // Predicated region
    $region46: #{tpu_custom_call.1} parent=1 // pred_check
      _
    $region47: #{tpu_custom_call.1} parent=1 // pred_check_branch
      %1236 = sbr.rel (0) target = $region49
    $region48: #{tpu_custom_call.1} parent=1 // pred_region
      %1237 = dma.done [#allocation4], 1024
    $region49: #{tpu_custom_call.1} parent=1 // pred_fallthru
      _
    %1238 = vsyncpa [#allocation3], 1
    %1239 = vsyncpa [#allocation6], 1
    %1240 = vsyncpa [#allocation9], 1
    %1241 = vsyncpa [#allocation4], 1

</llo_original>
